<compile_context>
chip_gen: v7x
topology: tpu7x:2x2x1
jax: 0.10.0
libtpu: 0.0.40
codegen_flags: <defaults>
</compile_context>

<pallas_src>
import jax
import jax.numpy as jnp
from jax.experimental import pallas as pl
from jax.experimental.pallas import tpu as pltpu


# --------------------------------------------------------------------------
# Tiling heuristics
# --------------------------------------------------------------------------
def _divisor_tile(dim: int, unit: int, cap: int) -> int:
    """Largest divisor of `dim` that is a multiple of `unit` and <= `cap`.

    Falls back to the full extent `dim` when `dim` is not a multiple of `unit`
    (block dim == full array dim is always legal) or when `dim` already fits.
    """
    if dim % unit != 0 or dim <= cap:
        return dim
    best = unit                      # unit always divides dim in this branch
    d = unit
    limit = min(dim, cap)
    while d <= limit:
        if dim % d == 0:
            best = d
        d += unit
    return best


def _vmem_budget():
    """Per-chip (streamed-block budget, scoped VMEM limit) in bytes."""
    try:  # v5e/v6e: 128 MiB physical VMEM; v7x: 64 MiB per TensorCore.
        cap = int(pltpu.get_tpu_info().vmem_capacity_bytes)
    except Exception:
        cap = 64 << 20               # conservative (v7x per-TC) fallback
    block_budget = max(1 << 20, min(8 << 20, cap // 16))   # 8 MiB v5e/v6e, 4 MiB v7x
    vmem_limit = min(cap // 2, 64 << 20)                    # 64 MiB v5e/v6e, 32 MiB v7x
    return block_budget, vmem_limit


def _pick_tiles(C: int, N: int, itemsize: int, block_budget: int):
    """Choose (channel tile, lane tile) so the streamed block is ~block_budget."""
    max_elems = max(block_budget // itemsize, 8 * 128)
    # Lane tile over N only when N is 128-aligned; otherwise keep the full row
    # and let the channel-block axis provide the pipelining (CNN 7x7/14x14 case).
    tn = _divisor_tile(N, 128, max(128, max_elems // max(min(C, 8), 1)))
    # Channel tile (multiple of 8, or full C) filling the rest of the budget.
    tc = _divisor_tile(C, 8, max(8, max_elems // tn))
    return tc, tn


# --------------------------------------------------------------------------
# Kernels
# --------------------------------------------------------------------------
def _scores_kernel(grad_ref, scores_ref):
    """Pass 1: scores[c] = sum over batch + spatial of gradients[., c, .].

    grad_ref:   (TC, TN) gradient tile (batch dim squeezed by BlockSpec)
    scores_ref: (TC, 1)  resident f32 output block, used as the accumulator
    """
    b, t = pl.program_id(1), pl.program_id(2)

    @pl.when((b == 0) & (t == 0))
    def _init():
        scores_ref[...] = jnp.zeros_like(scores_ref)

    # Per-tile cross-lane reduce rides the otherwise-idle XLU slot (the pass is
    # HBM/DMA-bound); only a (TC, 1) residual lives in VMEM.
    scores_ref[...] += jnp.sum(
        grad_ref[...].astype(jnp.float32), axis=-1, keepdims=True)


def _heat_kernel(scores_ref, act_ref, heat_ref, max_ref):
    """Pass 2: heat[b, n] = relu(sum_c acts[b, c, n] * scores[c]) + block max.

    scores_ref: (TC, 1)  channel-weight slice for this channel block
    act_ref:    (TC, TN) activation tile (batch dim squeezed)
    heat_ref:   (1, TN)  resident f32 output block (accumulated over C blocks)
    max_ref:    (1, 128) per-(b, t)-block maximum, lane-broadcast
    """
    cb = pl.program_id(2)

    @pl.when(cb == 0)
    def _init():
        heat_ref[...] = jnp.zeros_like(heat_ref)

    acts = act_ref[...].astype(jnp.float32)                       # (TC, TN)
    heat_ref[...] += jnp.sum(acts * scores_ref[...], axis=0, keepdims=True)

    @pl.when(cb == pl.num_programs(2) - 1)
    def _finalize():
        heat = jnp.maximum(heat_ref[...], 0.0)                    # ReLU
        heat_ref[...] = heat
        max_ref[...] = jnp.broadcast_to(
            jnp.max(heat, axis=-1, keepdims=True), max_ref.shape)


# --------------------------------------------------------------------------
# Wrapper
# --------------------------------------------------------------------------
def gradcam(activation_maps: jax.Array, gradients: jax.Array,
            *, block_budget_bytes: int | None = None) -> jax.Array:
    """Grad-CAM heatmap from hooked activations/gradients, NCHW inputs.

    Returns the normalized heatmap squeezed, i.e. [H, W] when B == 1 (matching
    the PyTorch module); [B, H, W] for B > 1 with the same global-max norm.
    bf16 (or f32) inputs are streamed in their native dtype; math is f32.
    """
    B, C, H, W = activation_maps.shape
    N = H * W
    # Free reshapes, no transpose -> no extra HBM copy.
    acts = activation_maps.reshape(B, C, N)
    grads = gradients.reshape(B, C, N)

    itemsize = max(jnp.dtype(acts.dtype).itemsize, jnp.dtype(grads.dtype).itemsize)
    total_bytes = B * C * N * itemsize
    auto_budget, vmem_limit = _vmem_budget()
    if block_budget_bytes is None:
        # Keep >= ~4 pipeline steps for large inputs; never drop below 64 KiB.
        block_budget_bytes = max(min(auto_budget, total_bytes // 4), 64 * 1024)
    tc, tn = _pick_tiles(C, N, itemsize, block_budget_bytes)
    ncb, nt = C // tc, N // tn

    # ---- Pass 1: per-channel raw sums of gradients -------------------------
    # Channel-block axis outermost & "parallel" (disjoint score slices per TC
    # on v7x); batch and lane-tile axes are reductions -> "arbitrary".
    scores = pl.pallas_call(
        _scores_kernel,
        out_shape=jax.ShapeDtypeStruct((C, 1), jnp.float32),
        grid=(ncb, B, nt),
        in_specs=[pl.BlockSpec((None, tc, tn), lambda cb, b, t: (b, cb, t))],
        out_specs=pl.BlockSpec((tc, 1), lambda cb, b, t: (cb, 0)),
        compiler_params=pltpu.CompilerParams(
            dimension_semantics=("parallel", "arbitrary", "arbitrary"),
            vmem_limit_bytes=vmem_limit),
        cost_estimate=pl.CostEstimate(
            flops=B * C * N,
            transcendentals=0,
            bytes_accessed=B * C * N * jnp.dtype(grads.dtype).itemsize + C * 4),
    )(grads)

    # ---- Pass 2: channel-weighted reduce + ReLU + per-block max ------------
    # (B, lane-tile) axes independent -> "parallel"; channel-block reduction is
    # innermost "arbitrary" accumulating into the resident (1, TN) output.
    heat, block_max = pl.pallas_call(
        _heat_kernel,
        out_shape=(
            jax.ShapeDtypeStruct((B, N), jnp.float32),
            jax.ShapeDtypeStruct((B, nt * 128), jnp.float32),
        ),
        grid=(B, nt, ncb),
        in_specs=[
            pl.BlockSpec((tc, 1), lambda b, t, cb: (cb, 0)),
            pl.BlockSpec((None, tc, tn), lambda b, t, cb: (b, cb, t)),
        ],
        out_specs=(
            pl.BlockSpec((1, tn), lambda b, t, cb: (b, t)),
            pl.BlockSpec((1, 128), lambda b, t, cb: (b, t)),
        ),
        compiler_params=pltpu.CompilerParams(
            dimension_semantics=("parallel", "parallel", "arbitrary"),
            vmem_limit_bytes=vmem_limit),
        cost_estimate=pl.CostEstimate(
            flops=2 * B * C * N,
            transcendentals=0,
            bytes_accessed=(B * C * N * jnp.dtype(acts.dtype).itemsize
                            + B * N * 4 + B * nt * 512 + C * 4)),
    )(scores, acts)

    heat = heat.reshape(B, H, W)
    # Global-max normalize from the tiny per-block maxima (no full re-read of
    # heat). Positive raw-sum scale cancels exactly here.
    # NOTE: NaN/Inf if every ReLU'd value is 0, same behavior as PyTorch.
    heat = heat / jnp.max(block_max)
    return jnp.squeeze(heat)


def _gradcam_ref(activation_maps, gradients):
    """Pure-JAX reference mirroring the PyTorch _compute_cam tail."""
    scores = jnp.mean(gradients, axis=(0, 2, 3))                    # [C]
    weighted = activation_maps * scores[None, :, None, None]
    heat = jnp.squeeze(jnp.mean(weighted, axis=1))
    heat = jnp.maximum(heat, 0.0)
    return heat / jnp.max(heat)


if __name__ == "__main__":
    # TODO(synk): the VQA model forward/backward producing the hooked tensors
    # (and the processor encoding / PIL jet-colormap superimposition) is
    # external to the kernel; deterministic synthetic activations/gradients
    # stand in for the hooks.
    def _check(B, C, H, W, key, dtype=jnp.float32,
               block_budget_bytes=None, tol=1e-4):
        k_act, k_grad = jax.random.split(key)
        acts = jax.random.uniform(k_act, (B, C, H, W), dtype=jnp.float32).astype(dtype)
        grads = jax.random.uniform(k_grad, (B, C, H, W), dtype=jnp.float32).astype(dtype)
        cam = jax.block_until_ready(
            gradcam(acts, grads, block_budget_bytes=block_budget_bytes))
        ref = _gradcam_ref(acts.astype(jnp.float32), grads.astype(jnp.float32))
        assert cam.shape == ref.shape, (cam.shape, ref.shape)
        assert jnp.allclose(cam, ref, atol=tol, rtol=tol), "mismatch vs reference"
        return cam

    key = jax.random.PRNGKey(0)
    k0, k1, k2, k3 = jax.random.split(key, 4)

    # B == 1, 128-aligned map: the module's intended use (squeeze -> [H, W]).
    cam = _check(1, 8, 32, 32, k0)
    assert cam.shape == (32, 32), cam.shape

    # B > 1 with a small forced block budget: exercises channel-block, batch
    # and lane-tile grid axes (ncb=2, B=2, nt=4) and the accumulate/finalize
    # paths of both passes.
    _check(2, 16, 32, 32, k1, block_budget_bytes=8 * 256 * 4)

    # Non-128-aligned spatial map (14x14 CNN Grad-CAM shape): full-row lane
    # tile, channel-block axis (ncb=4) provides the pipelining.
    _check(1, 32, 14, 14, k2, block_budget_bytes=8 * 196 * 4)

    # bf16 hooked tensors stream at half the HBM bytes; in-tile upcast to f32.
    _check(2, 8, 16, 16, k3, dtype=jnp.bfloat16, tol=1e-3)

    print("KERNEL_OK")
</pallas_src>

<mosaic_0001>
module attributes {stable_mosaic.version = 11 : i64} {
  func.func @_scores_kernel(%arg0: i32, %arg1: i32, %arg2: i32, %arg3: memref<1x8x1024xf32, #tpu.memory_space<vmem>>, %arg4: memref<8x1xf32, #tpu.memory_space<vmem>>) attributes {dimension_semantics = [#tpu.dimension_semantics<parallel>, #tpu.dimension_semantics<arbitrary>, #tpu.dimension_semantics<arbitrary>], iteration_bounds = array<i64: 1, 1, 1>, scalar_prefetch = 0 : i64, scratch_operands = 0 : i64, tpu.core_type = #tpu.core_type<tc>, window_params = [{transform_indices = @transform_0, window_bounds = array<i64: 1, 8, 1024>}, {transform_indices = @transform_1, window_bounds = array<i64: 8, 1>}]} {
    %c0_i32 = arith.constant 0 : i32
    %0 = arith.cmpi eq, %arg1, %c0_i32 : i32
    %c0_i32_0 = arith.constant 0 : i32
    %1 = arith.cmpi eq, %arg2, %c0_i32_0 : i32
    %2 = arith.andi %0, %1 : i1
    %3 = arith.extui %2 : i1 to i32
    %c0_i32_1 = arith.constant 0 : i32
    %4 = arith.cmpi ne, %3, %c0_i32_1 : i32
    scf.if %4 {
      %cst_8 = arith.constant 0.000000e+00 : f32
      %12 = vector.broadcast %cst_8 : f32 to vector<8x1xf32>
      %c0_9 = arith.constant 0 : index
      %c0_10 = arith.constant 0 : index
      %13 = vector.load %arg4[%c0_9, %c0_10] : memref<8x1xf32, #tpu.memory_space<vmem>>, vector<8x1xf32>
      tpu.vector_store %arg4[%c0_9, %c0_10], %12 {strides = array<i32>} : memref<8x1xf32, #tpu.memory_space<vmem>>, vector<8x1xf32>,
    } else {
    }
    %c0 = arith.constant 0 : index
    %c0_2 = arith.constant 0 : index
    %5 = vector.load %arg4[%c0, %c0_2] : memref<8x1xf32, #tpu.memory_space<vmem>>, vector<8x1xf32>
    %c0_3 = arith.constant 0 : index
    %c0_4 = arith.constant 0 : index
    %c0_5 = arith.constant 0 : index
    %6 = vector.load %arg3[%c0_3, %c0_4, %c0_5] : memref<1x8x1024xf32, #tpu.memory_space<vmem>>, vector<1x8x1024xf32>
    %7 = vector.shape_cast %6 : vector<1x8x1024xf32> to vector<8x1024xf32>
    %cst = arith.constant dense<0.000000e+00> : vector<8xf32>
    %8 = vector.multi_reduction <add>, %7, %cst [1] : vector<8x1024xf32> to vector<8xf32>
    %9 = vector.shape_cast %8 : vector<8xf32> to vector<8x1xf32>
    %10 = arith.addf %5, %9 : vector<8x1xf32>
    %c0_6 = arith.constant 0 : index
    %c0_7 = arith.constant 0 : index
    %11 = vector.load %arg4[%c0_6, %c0_7] : memref<8x1xf32, #tpu.memory_space<vmem>>, vector<8x1xf32>
    tpu.vector_store %arg4[%c0_6, %c0_7], %10 {strides = array<i32>} : memref<8x1xf32, #tpu.memory_space<vmem>>, vector<8x1xf32>,
    return
  }
  func.func @transform_0(%arg0: i32, %arg1: i32, %arg2: i32) -> (i32, i32, i32) {
    %c0_i32 = arith.constant 0 : i32
    return %arg1, %arg0, %arg2 : i32, i32, i32
  }
  func.func @transform_1(%arg0: i32, %arg1: i32, %arg2: i32) -> (i32, i32) {
    %c0_i32 = arith.constant 0 : i32
    %c0_i32_0 = arith.constant 0 : i32
    return %arg0, %c0_i32 : i32, i32
  }
}

</mosaic_0001>

<llo_original>
// kernel: tpu_custom_call.1
$region0: #{tpu_custom_call.1}
  #allocation0 [shape = 'u32[]', space=smem, size = 0x4, offset = 0x4, fixed_abs, tag = 'smem constant byte address 0x4 - core index']
  #allocation1 [shape = 'u32[144,128]{1,0:T(1,128)}', space=vmem, size = 0x12000, scoped, tag = 'internal scratch']
  %s0 = inlined_call_operand.hbm [shape: f32[1,8,1024], index: 0, kind: input, shape index: {}]
  %s1 = inlined_call_operand.vmem [shape: f32[8,1], index: 1, kind: output, shape index: {}]
  %s2 = sld [smem:[#allocation0]]
  $region22: #{tpu_custom_call.1} parent=0
    _
  %s4 = ssub.s32 1, %s2
  %s5 = scalar_select 0, %s4, %s2
  $region1: #{tpu_custom_call.1} parent=0
    #allocation2 [shape = 'u8[32768]{0}', space=vmem, size = 0x8000, scoped, tag = 'input window, operand 0, single buffered']
    #allocation3 [shape = 's32[1]{0}', space=sflag, size = 0x4, scoped, tag = 'scoped memory for tpu_custom_call.1']
    %6 = vsyncpa [#allocation3], 0
    // Predicated region
    $region2: #{tpu_custom_call.1} parent=1 // pred_check
      _
    $region3: #{tpu_custom_call.1} parent=1 // pred_check_branch
      %8 = sbr.rel (0) target = $region5
    $region4: #{tpu_custom_call.1} parent=1 // pred_region
      %s10 = ssub.s32 1024, 1024
      %11 = vsyncadd [#allocation3], %s10
      %s13 = sshll.u32 [#allocation2], 4
      %s14 = int_to_ptr.vmem [resolvable:$true] %s13
      %16 = dma.hbm_to_vmem [thread:$0]  %s0, 1024, %s14, [#allocation3]
    $region5: #{tpu_custom_call.1} parent=1 // pred_fallthru
      _
    // Predicated region
    $region6: #{tpu_custom_call.1} parent=1 // pred_check
      _
    $region7: #{tpu_custom_call.1} parent=1 // pred_check_branch
      %18 = sbr.rel (0) target = $region9
    $region8: #{tpu_custom_call.1} parent=1 // pred_region
      %19 = dma.done [#allocation3], 1024
    $region9: #{tpu_custom_call.1} parent=1 // pred_fallthru
      _
    %p20 = scmp.eq.s32.totalorder 0, 0
    %p21 = scmp.eq.s32.totalorder 0, 0
    %p22 = pnand %p20, %p21
    %p23 = pneg %p22
    // Predicated region
    $region10: #{tpu_custom_call.1} parent=1 // pred_check
      _
    $region11: #{tpu_custom_call.1} parent=1 // pred_check_branch
      %25 = sbr.rel (%p22) target = $region13
    $region12: #{tpu_custom_call.1} parent=1 // pred_region
      %vm26 = vcmask 7168
      %27 = vst.msk [vmem:[%s1] sm:$0xff] %vm26, 0.0
    $region13: #{tpu_custom_call.1} parent=1 // pred_fallthru
      _
    %v28 = vld [vmem:[%s1] sm:$0xff]
    %v29 = vld [vmem:[#allocation2] sm:$0xff]
    %v30 = vld [vmem:[#allocation2 + $0x8] sm:$0xff]
    %v31 = vld [vmem:[#allocation2 + $0x10] sm:$0xff]
    %v32 = vld [vmem:[#allocation2 + $0x18] sm:$0xff]
    %v33 = vld [vmem:[#allocation2 + $0x20] sm:$0xff]
    %v34 = vld [vmem:[#allocation2 + $0x28] sm:$0xff]
    %v35 = vld [vmem:[#allocation2 + $0x30] sm:$0xff]
    %v36 = vld [vmem:[#allocation2 + $0x38] sm:$0xff]
    %v37 = vadd.f32 %v29, %v30
    %v38 = vadd.f32 %v37, %v31
    %v39 = vadd.f32 %v38, %v32
    %v40 = vadd.f32 %v39, %v33
    %v41 = vadd.f32 %v40, %v34
    %v42 = vadd.f32 %v41, %v35
    %v43 = vadd.f32 %v42, %v36
    %44 = vadd.xlane.f32.xlu0 %v43
    %v45 = vpop.xlane.xlu0 %44
    %v46 = vadd.f32 %v28, %v45
    %vm47 = vcmask 7168
    %48 = vst.msk [vmem:[%s1] sm:$0xff] %vm47, %v46
    // Predicated region
    $region14: #{tpu_custom_call.1} parent=1 // pred_check
      _
    $region15: #{tpu_custom_call.1} parent=1 // pred_check_branch
      %50 = sbr.rel (0) target = $region17
    $region16: #{tpu_custom_call.1} parent=1 // pred_region
      _
    $region17: #{tpu_custom_call.1} parent=1 // pred_fallthru
      _
    // Predicated region
    $region18: #{tpu_custom_call.1} parent=1 // pred_check
      _
    $region19: #{tpu_custom_call.1} parent=1 // pred_check_branch
      %52 = sbr.rel (0) target = $region21
    $region20: #{tpu_custom_call.1} parent=1 // pred_region
      _
    $region21: #{tpu_custom_call.1} parent=1 // pred_fallthru
      _
    %53 = vsyncpa [#allocation3], 1

</llo_original>
